<compile_context>
chip_gen: v7x
topology: tpu7x:2x2x1
jax: 0.10.0
libtpu: 0.0.40
codegen_flags: <defaults>
</compile_context>

<pallas_src>
import functools

import jax
import jax.numpy as jnp
from jax import lax
from jax.experimental import pallas as pl
from jax.experimental.pallas import tpu as pltpu

# ----------------------------- model config ---------------------------------
N_CLASSES = 10
C_IN = 3
C_OUT = 8
KH = KW = 3
N_TAPS = C_IN * KH * KW          # 27 real im2col rows
K_PAD = 32                       # MXU-friendly contraction size
BIAS_ROW = N_TAPS                # row 27 of the tap matrix is all-ones (bias)

IMAGENET_MEAN = (0.485, 0.456, 0.406)
IMAGENET_STD = (0.229, 0.224, 0.225)


# ----------------------------- fused kernels ---------------------------------
def _make_kernels(bi, h, w):
    """Build the fused conv3x3 + ReLU + GAP + FC kernels for a (bi,h,w) block."""
    hw = h * w
    inv_hw = 1.0 / float(hw)

    def _shift_lanes(v, d):
        # s[..., j] = v[..., (j + d) % hw]; wrapped lanes are fixed up by the
        # border mask.  Written as an explicit lane rotation (equivalent to
        # pltpu.roll by (-d) % hw along the last axis) so the direction is
        # unambiguous.
        k = d % hw
        if k == 0:
            return v
        return jnp.concatenate([v[..., k:], v[..., :k]], axis=-1)

    def _logits(x_ref, wb_ref, msk_ref, fill_ref, fcw_ref, fcb_ref, taps_ref):
        # Constant rows of the im2col matrix: bias row (ones) + zero padding.
        taps_ref[:, BIAS_ROW:BIAS_ROW + 1, :] = jnp.ones((bi, 1, hw),
                                                         jnp.float32)
        taps_ref[:, BIAS_ROW + 1:, :] = jnp.zeros(
            (bi, K_PAD - BIAS_ROW - 1, hw), jnp.float32)

        # Build the 27 shifted taps, 3 channels at a time, on lane-dense rows
        # of length H*W.  The border mask re-creates the "zero padding" of the
        # normalized input, which after weight folding is the raw channel mean.
        x = x_ref[...]                                        # [bi, C_IN, hw]
        for kh in range(KH):
            for kw in range(KW):
                t = kh * KW + kw
                d = (kh - 1) * w + (kw - 1)
                mk = msk_ref[t:t + 1, :, :]                   # [1, C_IN, hw]
                fl = fill_ref[t:t + 1, :, :]                  # [1, C_IN, hw]
                taps_ref[:, t * C_IN:(t + 1) * C_IN, :] = (
                    _shift_lanes(x, d) * mk + fl)

        # One batched MXU matmul per block: [bi, C_OUT, 32] @ [bi, 32, H*W].
        conv = lax.dot_general(
            wb_ref[...], taps_ref[...],
            dimension_numbers=(((2,), (1,)), ((0,), (0,))),
            preferred_element_type=jnp.float32)               # [bi, C_OUT, hw]

        # ReLU -> global average pool -> FC, all on lane-dense data in VMEM.
        pooled = jnp.sum(jnp.maximum(conv, 0.0), axis=-1) * inv_hw  # [bi, C_OUT]
        logits = jnp.dot(pooled, fcw_ref[...],
                         preferred_element_type=jnp.float32)
        return logits + fcb_ref[...]                          # [bi, N_CLASSES]

    def probs_kernel(x_ref, wb_ref, msk_ref, fill_ref, fcw_ref, fcb_ref,
                     o_ref, taps_ref):
        # inference path: softmax(logits) per image, stored as one [bi, 10] block
        logits = _logits(x_ref, wb_ref, msk_ref, fill_ref, fcw_ref, fcb_ref,
                         taps_ref)
        m = jnp.max(logits, axis=-1, keepdims=True)
        e = jnp.exp(logits - m)
        o_ref[...] = e / jnp.sum(e, axis=-1, keepdims=True)

    def nll_kernel(x_ref, y_ref, wb_ref, msk_ref, fill_ref, fcw_ref, fcb_ref,
                   o_ref, taps_ref):
        # training path: per-image negative log-likelihood (no probs written)
        logits = _logits(x_ref, wb_ref, msk_ref, fill_ref, fcw_ref, fcb_ref,
                         taps_ref)
        m = jnp.max(logits, axis=-1, keepdims=True)
        lse = m + jnp.log(jnp.sum(jnp.exp(logits - m), axis=-1, keepdims=True))
        cols = lax.broadcasted_iota(jnp.int32, (bi, N_CLASSES), 1)
        picked = jnp.sum(jnp.where(cols == y_ref[...], logits, 0.0),
                         axis=-1, keepdims=True)
        o_ref[...] = lse - picked                             # [bi, 1]

    return probs_kernel, nll_kernel


# ----------------------------- wrapper helpers --------------------------------
def init_params(key):
    k1, k2, k3, k4 = jax.random.split(key, 4)
    conv_w = 0.1 * jax.random.normal(k1, (C_OUT, C_IN, KH, KW), jnp.float32)
    conv_b = 0.1 * jax.random.normal(k2, (C_OUT,), jnp.float32)
    fc_w = 0.1 * jax.random.normal(k3, (C_OUT, N_CLASSES), jnp.float32)
    fc_b = 0.1 * jax.random.normal(k4, (N_CLASSES,), jnp.float32)
    return dict(conv_w=conv_w, conv_b=conv_b, fc_w=fc_w, fc_b=fc_b)


def _folded_conv_matrix(params):
    """Fold (x - mean)/std into the conv weights; folded bias -> column 27."""
    w = params["conv_w"].astype(jnp.float32)                  # [O, C, KH, KW]
    mean = jnp.asarray(IMAGENET_MEAN, jnp.float32).reshape(1, C_IN, 1, 1)
    std = jnp.asarray(IMAGENET_STD, jnp.float32).reshape(1, C_IN, 1, 1)
    w_scaled = w / std
    # shift-major column order (kh, kw, c): matches the in-kernel tap rows.
    w_eff = jnp.transpose(w_scaled, (0, 2, 3, 1)).reshape(C_OUT, N_TAPS)
    b_eff = params["conv_b"].astype(jnp.float32) - jnp.sum(w_scaled * mean,
                                                           axis=(1, 2, 3))
    w_pad = jnp.zeros((C_OUT, K_PAD), jnp.float32)
    w_pad = w_pad.at[:, :N_TAPS].set(w_eff).at[:, BIAS_ROW].set(b_eff)
    return w_pad                                              # [C_OUT, 32]


def _border_tables(h, w):
    """Border masks / mean-fill rows for the 9 shifted 3x3 taps."""
    hw = h * w
    pos = jnp.arange(hw, dtype=jnp.int32)
    r, c = pos // w, pos % w
    mean = jnp.asarray(IMAGENET_MEAN, jnp.float32).reshape(1, C_IN, 1)
    masks, fills = [], []
    for kh in range(KH):
        for kw in range(KW):
            rr, cc = r + (kh - 1), c + (kw - 1)
            ok = ((rr >= 0) & (rr < h) & (cc >= 0) & (cc < w))
            ok = ok.astype(jnp.float32).reshape(1, 1, hw)
            masks.append(jnp.broadcast_to(ok, (1, C_IN, hw)))
            fills.append((1.0 - ok) * mean)                   # [1, C_IN, hw]
    return (jnp.concatenate(masks, axis=0),                   # [9, C_IN, hw]
            jnp.concatenate(fills, axis=0))                   # [9, C_IN, hw]


def _pick_batch_block(n):
    """Images per grid step: sublane friendly and >= 2 grid steps when possible
    (so v7x can shard the 'parallel' grid across its two TensorCores)."""
    if n <= 8:
        return n
    half = ((n + 1) // 2) // 8 * 8
    return max(8, min(32, half))


# ----------------------------- forward ---------------------------------------
@functools.partial(jax.jit, static_argnames=("with_label",))
def _forward_impl(params, x, y, with_label):
    n, cin, h, w = x.shape
    assert cin == C_IN, f"expected {C_IN} input channels, got {cin}"
    hw = h * w
    bi = _pick_batch_block(n)
    grid = (pl.cdiv(n, bi),)

    x2 = x.astype(jnp.float32).reshape(n, C_IN, hw)           # lane-dense H*W
    wb = jnp.broadcast_to(_folded_conv_matrix(params)[None],
                          (bi, C_OUT, K_PAD))
    mask, fill = _border_tables(h, w)
    fc_w = params["fc_w"].astype(jnp.float32)                 # [8, 10]
    fc_b = params["fc_b"].astype(jnp.float32).reshape(1, N_CLASSES)

    probs_kernel, nll_kernel = _make_kernels(bi, h, w)

    base_specs = [
        pl.BlockSpec((bi, C_IN, hw), lambda i: (i, 0, 0)),        # x
        pl.BlockSpec((bi, C_OUT, K_PAD), lambda i: (0, 0, 0)),    # folded conv w
        pl.BlockSpec((KH * KW, C_IN, hw), lambda i: (0, 0, 0)),   # border mask
        pl.BlockSpec((KH * KW, C_IN, hw), lambda i: (0, 0, 0)),   # border fill
        pl.BlockSpec((C_OUT, N_CLASSES), lambda i: (0, 0)),       # fc_w
        pl.BlockSpec((1, N_CLASSES), lambda i: (0, 0)),           # fc_b
    ]
    scratch = [pltpu.VMEM((bi, K_PAD, hw), jnp.float32)]          # im2col taps
    cparams = pltpu.CompilerParams(dimension_semantics=("parallel",))
    # TODO(synk): for large images, additionally tile H*W (with a 1-row halo)
    # and re-budget the block size against v7x's 64 MiB physical VMEM.

    if not with_label:
        return pl.pallas_call(
            probs_kernel,
            out_shape=jax.ShapeDtypeStruct((n, N_CLASSES), jnp.float32),
            grid_spec=pltpu.PrefetchScalarGridSpec(
                num_scalar_prefetch=0,
                grid=grid,
                in_specs=base_specs,
                out_specs=pl.BlockSpec((bi, N_CLASSES), lambda i: (i, 0)),
                scratch_shapes=scratch),
            compiler_params=cparams,
        )(x2, wb, mask, fill, fc_w, fc_b)

    # labeled path: per-image NLL computed in-kernel, mean taken in the wrapper
    y2 = y.reshape(-1, 1).astype(jnp.int32)
    in_specs = ([base_specs[0], pl.BlockSpec((bi, 1), lambda i: (i, 0))]
                + base_specs[1:])
    nll = pl.pallas_call(
        nll_kernel,
        out_shape=jax.ShapeDtypeStruct((n, 1), jnp.float32),
        grid_spec=pltpu.PrefetchScalarGridSpec(
            num_scalar_prefetch=0,
            grid=grid,
            in_specs=in_specs,
            out_specs=pl.BlockSpec((bi, 1), lambda i: (i, 0)),
            scratch_shapes=scratch),
        compiler_params=cparams,
    )(x2, y2, wb, mask, fill, fc_w, fc_b)
    return jnp.mean(nll)


def model_forward(params, x, y=None):
    """Mirrors Model.forward: probs if y is None, else mean cross-entropy."""
    if y is None:
        return _forward_impl(params, x, None, with_label=False)
    return _forward_impl(params, x, y, with_label=True)


# ----------------------------- pure-JAX reference ----------------------------
def _reference(params, x, y=None):
    mean = jnp.asarray(IMAGENET_MEAN, jnp.float32).reshape(1, C_IN, 1, 1)
    std = jnp.asarray(IMAGENET_STD, jnp.float32).reshape(1, C_IN, 1, 1)
    z = (x - mean) / std
    out = jax.lax.conv_general_dilated(
        z, params["conv_w"], window_strides=(1, 1), padding="SAME",
        dimension_numbers=("NCHW", "OIHW", "NCHW"),
        precision=jax.lax.Precision.HIGHEST)
    out = jnp.maximum(out + params["conv_b"].reshape(1, C_OUT, 1, 1), 0.0)
    pooled = jnp.mean(out, axis=(2, 3))
    logits = jnp.dot(pooled, params["fc_w"],
                     precision=jax.lax.Precision.HIGHEST) + params["fc_b"]
    if y is None:
        return jax.nn.softmax(logits, axis=-1)
    logp = jax.nn.log_softmax(logits, axis=-1)
    idx = jnp.arange(logits.shape[0])
    return -jnp.mean(logp[idx, y.reshape(-1)])


# ----------------------------- demo / self-test ------------------------------
if __name__ == "__main__":
    key = jax.random.PRNGKey(0)
    kx, kp = jax.random.split(key)

    # small image batch, NCHW like PyTorch
    x = jax.random.uniform(kx, (2, 3, 16, 16), jnp.float32)
    y = jnp.array([1, 7], dtype=jnp.int32)
    params = init_params(kp)

    probs = jax.block_until_ready(model_forward(params, x))       # y=None path
    loss = jax.block_until_ready(model_forward(params, x, y))     # labeled path

    probs_ref = _reference(params, x)
    loss_ref = _reference(params, x, y)

    assert probs.shape == (2, N_CLASSES)
    assert bool(jnp.all(jnp.isfinite(probs)))
    assert bool(jnp.allclose(jnp.sum(probs, axis=-1), 1.0, atol=1e-5))
    assert bool(jnp.allclose(probs, probs_ref, rtol=2e-3, atol=2e-3))
    assert bool(jnp.isfinite(loss))
    assert bool(jnp.allclose(loss, loss_ref, rtol=2e-3, atol=2e-3))

    print("KERNEL_OK")
</pallas_src>

<mosaic_0001>
module attributes {stable_mosaic.version = 11 : i64} {
  func.func @probs_kernel(%arg0: i32, %arg1: memref<2x3x256xf32, #tpu.memory_space<vmem>>, %arg2: memref<2x8x32xf32, #tpu.memory_space<vmem>>, %arg3: memref<9x3x256xf32, #tpu.memory_space<vmem>>, %arg4: memref<9x3x256xf32, #tpu.memory_space<vmem>>, %arg5: memref<8x10xf32, #tpu.memory_space<vmem>>, %arg6: memref<1x10xf32, #tpu.memory_space<vmem>>, %arg7: memref<2x10xf32, #tpu.memory_space<vmem>>, %arg8: memref<2x32x256xf32, #tpu.memory_space<vmem>>) attributes {dimension_semantics = [#tpu.dimension_semantics<parallel>], iteration_bounds = array<i64: 1>, scalar_prefetch = 0 : i64, scratch_operands = 1 : i64, tpu.core_type = #tpu.core_type<tc>, window_params = [{transform_indices = @transform_0, window_bounds = array<i64: 2, 3, 256>}, {pipeline_mode = #tpu.pipeline_mode<synchronous>, transform_indices = @transform_1, window_bounds = array<i64: 2, 8, 32>}, {pipeline_mode = #tpu.pipeline_mode<synchronous>, transform_indices = @transform_2, window_bounds = array<i64: 9, 3, 256>}, {pipeline_mode = #tpu.pipeline_mode<synchronous>, transform_indices = @transform_3, window_bounds = array<i64: 9, 3, 256>}, {pipeline_mode = #tpu.pipeline_mode<synchronous>, transform_indices = @transform_4, window_bounds = array<i64: 8, 10>}, {pipeline_mode = #tpu.pipeline_mode<synchronous>, transform_indices = @transform_5, window_bounds = array<i64: 1, 10>}, {transform_indices = @transform_6, window_bounds = array<i64: 2, 10>}]} {
    %cst = arith.constant 1.000000e+00 : f32
    %0 = vector.broadcast %cst : f32 to vector<2x1x256xf32>
    %c0 = arith.constant 0 : index
    %c27 = arith.constant 27 : index
    %c0_0 = arith.constant 0 : index
    %1 = vector.load %arg8[%c0, %c27, %c0_0] : memref<2x32x256xf32, #tpu.memory_space<vmem>>, vector<2x1x256xf32>
    tpu.vector_store %arg8[%c0, %c27, %c0_0], %0 {strides = array<i32>} : memref<2x32x256xf32, #tpu.memory_space<vmem>>, vector<2x1x256xf32>,
    %cst_1 = arith.constant 0.000000e+00 : f32
    %2 = vector.broadcast %cst_1 : f32 to vector<2x4x256xf32>
    %c0_2 = arith.constant 0 : index
    %c28 = arith.constant 28 : index
    %c0_3 = arith.constant 0 : index
    %3 = vector.load %arg8[%c0_2, %c28, %c0_3] : memref<2x32x256xf32, #tpu.memory_space<vmem>>, vector<2x4x256xf32>
    tpu.vector_store %arg8[%c0_2, %c28, %c0_3], %2 {strides = array<i32>} : memref<2x32x256xf32, #tpu.memory_space<vmem>>, vector<2x4x256xf32>,
    %c0_4 = arith.constant 0 : index
    %c0_5 = arith.constant 0 : index
    %c0_6 = arith.constant 0 : index
    %4 = vector.load %arg1[%c0_4, %c0_5, %c0_6] : memref<2x3x256xf32, #tpu.memory_space<vmem>>, vector<2x3x256xf32>
    %c0_7 = arith.constant 0 : index
    %c0_8 = arith.constant 0 : index
    %c0_9 = arith.constant 0 : index
    %5 = vector.load %arg3[%c0_7, %c0_8, %c0_9] : memref<9x3x256xf32, #tpu.memory_space<vmem>>, vector<1x3x256xf32>
    %c0_10 = arith.constant 0 : index
    %c0_11 = arith.constant 0 : index
    %c0_12 = arith.constant 0 : index
    %6 = vector.load %arg4[%c0_10, %c0_11, %c0_12] : memref<9x3x256xf32, #tpu.memory_space<vmem>>, vector<1x3x256xf32>
    %7 = vector.extract_strided_slice %4 {offsets = [0, 0, 239], sizes = [2, 3, 17], strides = [1, 1, 1]} : vector<2x3x256xf32> to vector<2x3x17xf32>
    %8 = vector.extract_strided_slice %4 {offsets = [0, 0, 0], sizes = [2, 3, 239], strides = [1, 1, 1]} : vector<2x3x256xf32> to vector<2x3x239xf32>
    %9 = tpu.concatenate %7, %8 in 2 : vector<2x3x17xf32>, vector<2x3x239xf32> -> vector<2x3x256xf32>
    %10 = vector.broadcast %5 : vector<1x3x256xf32> to vector<2x3x256xf32>
    %11 = arith.mulf %9, %10 : vector<2x3x256xf32>
    %12 = vector.broadcast %6 : vector<1x3x256xf32> to vector<2x3x256xf32>
    %13 = arith.addf %11, %12 : vector<2x3x256xf32>
    %c0_13 = arith.constant 0 : index
    %c0_14 = arith.constant 0 : index
    %c0_15 = arith.constant 0 : index
    %14 = vector.load %arg8[%c0_13, %c0_14, %c0_15] : memref<2x32x256xf32, #tpu.memory_space<vmem>>, vector<2x3x256xf32>
    tpu.vector_store %arg8[%c0_13, %c0_14, %c0_15], %13 {strides = array<i32>} : memref<2x32x256xf32, #tpu.memory_space<vmem>>, vector<2x3x256xf32>,
    %c1 = arith.constant 1 : index
    %c0_16 = arith.constant 0 : index
    %c0_17 = arith.constant 0 : index
    %15 = vector.load %arg3[%c1, %c0_16, %c0_17] : memref<9x3x256xf32, #tpu.memory_space<vmem>>, vector<1x3x256xf32>
    %c1_18 = arith.constant 1 : index
    %c0_19 = arith.constant 0 : index
    %c0_20 = arith.constant 0 : index
    %16 = vector.load %arg4[%c1_18, %c0_19, %c0_20] : memref<9x3x256xf32, #tpu.memory_space<vmem>>, vector<1x3x256xf32>
    %17 = vector.extract_strided_slice %4 {offsets = [0, 0, 240], sizes = [2, 3, 16], strides = [1, 1, 1]} : vector<2x3x256xf32> to vector<2x3x16xf32>
    %18 = vector.extract_strided_slice %4 {offsets = [0, 0, 0], sizes = [2, 3, 240], strides = [1, 1, 1]} : vector<2x3x256xf32> to vector<2x3x240xf32>
    %19 = tpu.concatenate %17, %18 in 2 : vector<2x3x16xf32>, vector<2x3x240xf32> -> vector<2x3x256xf32>
    %20 = vector.broadcast %15 : vector<1x3x256xf32> to vector<2x3x256xf32>
    %21 = arith.mulf %19, %20 : vector<2x3x256xf32>
    %22 = vector.broadcast %16 : vector<1x3x256xf32> to vector<2x3x256xf32>
    %23 = arith.addf %21, %22 : vector<2x3x256xf32>
    %c0_21 = arith.constant 0 : index
    %c3 = arith.constant 3 : index
    %c0_22 = arith.constant 0 : index
    %24 = vector.load %arg8[%c0_21, %c3, %c0_22] : memref<2x32x256xf32, #tpu.memory_space<vmem>>, vector<2x3x256xf32>
    tpu.vector_store %arg8[%c0_21, %c3, %c0_22], %23 {strides = array<i32>} : memref<2x32x256xf32, #tpu.memory_space<vmem>>, vector<2x3x256xf32>,
    %c2 = arith.constant 2 : index
    %c0_23 = arith.constant 0 : index
    %c0_24 = arith.constant 0 : index
    %25 = vector.load %arg3[%c2, %c0_23, %c0_24] : memref<9x3x256xf32, #tpu.memory_space<vmem>>, vector<1x3x256xf32>
    %c2_25 = arith.constant 2 : index
    %c0_26 = arith.constant 0 : index
    %c0_27 = arith.constant 0 : index
    %26 = vector.load %arg4[%c2_25, %c0_26, %c0_27] : memref<9x3x256xf32, #tpu.memory_space<vmem>>, vector<1x3x256xf32>
    %27 = vector.extract_strided_slice %4 {offsets = [0, 0, 241], sizes = [2, 3, 15], strides = [1, 1, 1]} : vector<2x3x256xf32> to vector<2x3x15xf32>
    %28 = vector.extract_strided_slice %4 {offsets = [0, 0, 0], sizes = [2, 3, 241], strides = [1, 1, 1]} : vector<2x3x256xf32> to vector<2x3x241xf32>
    %29 = tpu.concatenate %27, %28 in 2 : vector<2x3x15xf32>, vector<2x3x241xf32> -> vector<2x3x256xf32>
    %30 = vector.broadcast %25 : vector<1x3x256xf32> to vector<2x3x256xf32>
    %31 = arith.mulf %29, %30 : vector<2x3x256xf32>
    %32 = vector.broadcast %26 : vector<1x3x256xf32> to vector<2x3x256xf32>
    %33 = arith.addf %31, %32 : vector<2x3x256xf32>
    %c0_28 = arith.constant 0 : index
    %c6 = arith.constant 6 : index
    %c0_29 = arith.constant 0 : index
    %34 = vector.load %arg8[%c0_28, %c6, %c0_29] : memref<2x32x256xf32, #tpu.memory_space<vmem>>, vector<2x3x256xf32>
    tpu.vector_store %arg8[%c0_28, %c6, %c0_29], %33 {strides = array<i32>} : memref<2x32x256xf32, #tpu.memory_space<vmem>>, vector<2x3x256xf32>,
    %c3_30 = arith.constant 3 : index
    %c0_31 = arith.constant 0 : index
    %c0_32 = arith.constant 0 : index
    %35 = vector.load %arg3[%c3_30, %c0_31, %c0_32] : memref<9x3x256xf32, #tpu.memory_space<vmem>>, vector<1x3x256xf32>
    %c3_33 = arith.constant 3 : index
    %c0_34 = arith.constant 0 : index
    %c0_35 = arith.constant 0 : index
    %36 = vector.load %arg4[%c3_33, %c0_34, %c0_35] : memref<9x3x256xf32, #tpu.memory_space<vmem>>, vector<1x3x256xf32>
    %37 = vector.extract_strided_slice %4 {offsets = [0, 0, 255], sizes = [2, 3, 1], strides = [1, 1, 1]} : vector<2x3x256xf32> to vector<2x3x1xf32>
    %38 = vector.extract_strided_slice %4 {offsets = [0, 0, 0], sizes = [2, 3, 255], strides = [1, 1, 1]} : vector<2x3x256xf32> to vector<2x3x255xf32>
    %39 = tpu.concatenate %37, %38 in 2 : vector<2x3x1xf32>, vector<2x3x255xf32> -> vector<2x3x256xf32>
    %40 = vector.broadcast %35 : vector<1x3x256xf32> to vector<2x3x256xf32>
    %41 = arith.mulf %39, %40 : vector<2x3x256xf32>
    %42 = vector.broadcast %36 : vector<1x3x256xf32> to vector<2x3x256xf32>
    %43 = arith.addf %41, %42 : vector<2x3x256xf32>
    %c0_36 = arith.constant 0 : index
    %c9 = arith.constant 9 : index
    %c0_37 = arith.constant 0 : index
    %44 = vector.load %arg8[%c0_36, %c9, %c0_37] : memref<2x32x256xf32, #tpu.memory_space<vmem>>, vector<2x3x256xf32>
    tpu.vector_store %arg8[%c0_36, %c9, %c0_37], %43 {strides = array<i32>} : memref<2x32x256xf32, #tpu.memory_space<vmem>>, vector<2x3x256xf32>,
    %c4 = arith.constant 4 : index
    %c0_38 = arith.constant 0 : index
    %c0_39 = arith.constant 0 : index
    %45 = vector.load %arg3[%c4, %c0_38, %c0_39] : memref<9x3x256xf32, #tpu.memory_space<vmem>>, vector<1x3x256xf32>
    %c4_40 = arith.constant 4 : index
    %c0_41 = arith.constant 0 : index
    %c0_42 = arith.constant 0 : index
    %46 = vector.load %arg4[%c4_40, %c0_41, %c0_42] : memref<9x3x256xf32, #tpu.memory_space<vmem>>, vector<1x3x256xf32>
    %47 = vector.broadcast %45 : vector<1x3x256xf32> to vector<2x3x256xf32>
    %48 = arith.mulf %4, %47 : vector<2x3x256xf32>
    %49 = vector.broadcast %46 : vector<1x3x256xf32> to vector<2x3x256xf32>
    %50 = arith.addf %48, %49 : vector<2x3x256xf32>
    %c0_43 = arith.constant 0 : index
    %c12 = arith.constant 12 : index
    %c0_44 = arith.constant 0 : index
    %51 = vector.load %arg8[%c0_43, %c12, %c0_44] : memref<2x32x256xf32, #tpu.memory_space<vmem>>, vector<2x3x256xf32>
    tpu.vector_store %arg8[%c0_43, %c12, %c0_44], %50 {strides = array<i32>} : memref<2x32x256xf32, #tpu.memory_space<vmem>>, vector<2x3x256xf32>,
    %c5 = arith.constant 5 : index
    %c0_45 = arith.constant 0 : index
    %c0_46 = arith.constant 0 : index
    %52 = vector.load %arg3[%c5, %c0_45, %c0_46] : memref<9x3x256xf32, #tpu.memory_space<vmem>>, vector<1x3x256xf32>
    %c5_47 = arith.constant 5 : index
    %c0_48 = arith.constant 0 : index
    %c0_49 = arith.constant 0 : index
    %53 = vector.load %arg4[%c5_47, %c0_48, %c0_49] : memref<9x3x256xf32, #tpu.memory_space<vmem>>, vector<1x3x256xf32>
    %54 = vector.extract_strided_slice %4 {offsets = [0, 0, 1], sizes = [2, 3, 255], strides = [1, 1, 1]} : vector<2x3x256xf32> to vector<2x3x255xf32>
    %55 = vector.extract_strided_slice %4 {offsets = [0, 0, 0], sizes = [2, 3, 1], strides = [1, 1, 1]} : vector<2x3x256xf32> to vector<2x3x1xf32>
    %56 = tpu.concatenate %54, %55 in 2 : vector<2x3x255xf32>, vector<2x3x1xf32> -> vector<2x3x256xf32>
    %57 = vector.broadcast %52 : vector<1x3x256xf32> to vector<2x3x256xf32>
    %58 = arith.mulf %56, %57 : vector<2x3x256xf32>
    %59 = vector.broadcast %53 : vector<1x3x256xf32> to vector<2x3x256xf32>
    %60 = arith.addf %58, %59 : vector<2x3x256xf32>
    %c0_50 = arith.constant 0 : index
    %c15 = arith.constant 15 : index
    %c0_51 = arith.constant 0 : index
    %61 = vector.load %arg8[%c0_50, %c15, %c0_51] : memref<2x32x256xf32, #tpu.memory_space<vmem>>, vector<2x3x256xf32>
    tpu.vector_store %arg8[%c0_50, %c15, %c0_51], %60 {strides = array<i32>} : memref<2x32x256xf32, #tpu.memory_space<vmem>>, vector<2x3x256xf32>,
    %c6_52 = arith.constant 6 : index
    %c0_53 = arith.constant 0 : index
    %c0_54 = arith.constant 0 : index
    %62 = vector.load %arg3[%c6_52, %c0_53, %c0_54] : memref<9x3x256xf32, #tpu.memory_space<vmem>>, vector<1x3x256xf32>
    %c6_55 = arith.constant 6 : index
    %c0_56 = arith.constant 0 : index
    %c0_57 = arith.constant 0 : index
    %63 = vector.load %arg4[%c6_55, %c0_56, %c0_57] : memref<9x3x256xf32, #tpu.memory_space<vmem>>, vector<1x3x256xf32>
    %64 = vector.extract_strided_slice %4 {offsets = [0, 0, 15], sizes = [2, 3, 241], strides = [1, 1, 1]} : vector<2x3x256xf32> to vector<2x3x241xf32>
    %65 = vector.extract_strided_slice %4 {offsets = [0, 0, 0], sizes = [2, 3, 15], strides = [1, 1, 1]} : vector<2x3x256xf32> to vector<2x3x15xf32>
    %66 = tpu.concatenate %64, %65 in 2 : vector<2x3x241xf32>, vector<2x3x15xf32> -> vector<2x3x256xf32>
    %67 = vector.broadcast %62 : vector<1x3x256xf32> to vector<2x3x256xf32>
    %68 = arith.mulf %66, %67 : vector<2x3x256xf32>
    %69 = vector.broadcast %63 : vector<1x3x256xf32> to vector<2x3x256xf32>
    %70 = arith.addf %68, %69 : vector<2x3x256xf32>
    %c0_58 = arith.constant 0 : index
    %c18 = arith.constant 18 : index
    %c0_59 = arith.constant 0 : index
    %71 = vector.load %arg8[%c0_58, %c18, %c0_59] : memref<2x32x256xf32, #tpu.memory_space<vmem>>, vector<2x3x256xf32>
    tpu.vector_store %arg8[%c0_58, %c18, %c0_59], %70 {strides = array<i32>} : memref<2x32x256xf32, #tpu.memory_space<vmem>>, vector<2x3x256xf32>,
    %c7 = arith.constant 7 : index
    %c0_60 = arith.constant 0 : index
    %c0_61 = arith.constant 0 : index
    %72 = vector.load %arg3[%c7, %c0_60, %c0_61] : memref<9x3x256xf32, #tpu.memory_space<vmem>>, vector<1x3x256xf32>
    %c7_62 = arith.constant 7 : index
    %c0_63 = arith.constant 0 : index
    %c0_64 = arith.constant 0 : index
    %73 = vector.load %arg4[%c7_62, %c0_63, %c0_64] : memref<9x3x256xf32, #tpu.memory_space<vmem>>, vector<1x3x256xf32>
    %74 = vector.extract_strided_slice %4 {offsets = [0, 0, 16], sizes = [2, 3, 240], strides = [1, 1, 1]} : vector<2x3x256xf32> to vector<2x3x240xf32>
    %75 = vector.extract_strided_slice %4 {offsets = [0, 0, 0], sizes = [2, 3, 16], strides = [1, 1, 1]} : vector<2x3x256xf32> to vector<2x3x16xf32>
    %76 = tpu.concatenate %74, %75 in 2 : vector<2x3x240xf32>, vector<2x3x16xf32> -> vector<2x3x256xf32>
    %77 = vector.broadcast %72 : vector<1x3x256xf32> to vector<2x3x256xf32>
    %78 = arith.mulf %76, %77 : vector<2x3x256xf32>
    %79 = vector.broadcast %73 : vector<1x3x256xf32> to vector<2x3x256xf32>
    %80 = arith.addf %78, %79 : vector<2x3x256xf32>
    %c0_65 = arith.constant 0 : index
    %c21 = arith.constant 21 : index
    %c0_66 = arith.constant 0 : index
    %81 = vector.load %arg8[%c0_65, %c21, %c0_66] : memref<2x32x256xf32, #tpu.memory_space<vmem>>, vector<2x3x256xf32>
    tpu.vector_store %arg8[%c0_65, %c21, %c0_66], %80 {strides = array<i32>} : memref<2x32x256xf32, #tpu.memory_space<vmem>>, vector<2x3x256xf32>,
    %c8 = arith.constant 8 : index
    %c0_67 = arith.constant 0 : index
    %c0_68 = arith.constant 0 : index
    %82 = vector.load %arg3[%c8, %c0_67, %c0_68] : memref<9x3x256xf32, #tpu.memory_space<vmem>>, vector<1x3x256xf32>
    %c8_69 = arith.constant 8 : index
    %c0_70 = arith.constant 0 : index
    %c0_71 = arith.constant 0 : index
    %83 = vector.load %arg4[%c8_69, %c0_70, %c0_71] : memref<9x3x256xf32, #tpu.memory_space<vmem>>, vector<1x3x256xf32>
    %84 = vector.extract_strided_slice %4 {offsets = [0, 0, 17], sizes = [2, 3, 239], strides = [1, 1, 1]} : vector<2x3x256xf32> to vector<2x3x239xf32>
    %85 = vector.extract_strided_slice %4 {offsets = [0, 0, 0], sizes = [2, 3, 17], strides = [1, 1, 1]} : vector<2x3x256xf32> to vector<2x3x17xf32>
    %86 = tpu.concatenate %84, %85 in 2 : vector<2x3x239xf32>, vector<2x3x17xf32> -> vector<2x3x256xf32>
    %87 = vector.broadcast %82 : vector<1x3x256xf32> to vector<2x3x256xf32>
    %88 = arith.mulf %86, %87 : vector<2x3x256xf32>
    %89 = vector.broadcast %83 : vector<1x3x256xf32> to vector<2x3x256xf32>
    %90 = arith.addf %88, %89 : vector<2x3x256xf32>
    %c0_72 = arith.constant 0 : index
    %c24 = arith.constant 24 : index
    %c0_73 = arith.constant 0 : index
    %91 = vector.load %arg8[%c0_72, %c24, %c0_73] : memref<2x32x256xf32, #tpu.memory_space<vmem>>, vector<2x3x256xf32>
    tpu.vector_store %arg8[%c0_72, %c24, %c0_73], %90 {strides = array<i32>} : memref<2x32x256xf32, #tpu.memory_space<vmem>>, vector<2x3x256xf32>,
    %c0_74 = arith.constant 0 : index
    %c0_75 = arith.constant 0 : index
    %c0_76 = arith.constant 0 : index
    %92 = vector.load %arg2[%c0_74, %c0_75, %c0_76] : memref<2x8x32xf32, #tpu.memory_space<vmem>>, vector<2x8x32xf32>
    %c0_77 = arith.constant 0 : index
    %c0_78 = arith.constant 0 : index
    %c0_79 = arith.constant 0 : index
    %93 = vector.load %arg8[%c0_77, %c0_78, %c0_79] : memref<2x32x256xf32, #tpu.memory_space<vmem>>, vector<2x32x256xf32>
    %cst_80 = arith.constant dense<0.000000e+00> : vector<2x8x256xf32>
    %94 = tpu.matmul %92, %93, %cst_80 {dimension_numbers = #tpu.dot_dimension_numbers<[2], [1], [1], [2], [0, 0, 0, 1, 1, 2], [0], [0]>} : vector<2x8x32xf32>, vector<2x32x256xf32>, vector<2x8x256xf32> -> vector<2x8x256xf32>
    %cst_81 = arith.constant 0.000000e+00 : f32
    %95 = vector.broadcast %cst_81 : f32 to vector<2x8x256xf32>
    %96 = arith.maximumf %94, %95 : vector<2x8x256xf32>
    %cst_82 = arith.constant dense<0.000000e+00> : vector<2x8xf32>
    %97 = vector.multi_reduction <add>, %96, %cst_82 [2] : vector<2x8x256xf32> to vector<2x8xf32>
    %cst_83 = arith.constant 3.906250e-03 : f32
    %98 = vector.broadcast %cst_83 : f32 to vector<2x8xf32>
    %99 = arith.mulf %97, %98 : vector<2x8xf32>
    %c0_84 = arith.constant 0 : index
    %c0_85 = arith.constant 0 : index
    %100 = vector.load %arg5[%c0_84, %c0_85] : memref<8x10xf32, #tpu.memory_space<vmem>>, vector<8x10xf32>
    %cst_86 = arith.constant dense<0.000000e+00> : vector<2x10xf32>
    %101 = tpu.matmul %99, %100, %cst_86 {dimension_numbers = #tpu.dot_dimension_numbers<[1], [0], [0], [1], [0, 0, 1, 1], [], []>} : vector<2x8xf32>, vector<8x10xf32>, vector<2x10xf32> -> vector<2x10xf32>
    %c0_87 = arith.constant 0 : index
    %c0_88 = arith.constant 0 : index
    %102 = vector.load %arg6[%c0_87, %c0_88] : memref<1x10xf32, #tpu.memory_space<vmem>>, vector<1x10xf32>
    %103 = vector.broadcast %102 : vector<1x10xf32> to vector<2x10xf32>
    %104 = arith.addf %101, %103 : vector<2x10xf32>
    %cst_89 = arith.constant dense<0xFF800000> : vector<2xf32>
    %105 = vector.multi_reduction <maximumf>, %104, %cst_89 [1] : vector<2x10xf32> to vector<2xf32>
    %106 = vector.shape_cast %105 : vector<2xf32> to vector<2x1xf32>
    %107 = vector.broadcast %106 : vector<2x1xf32> to vector<2x10xf32>
    %108 = arith.subf %104, %107 : vector<2x10xf32>
    %109 = math.exp %108 : vector<2x10xf32>
    %cst_90 = arith.constant dense<0.000000e+00> : vector<2xf32>
    %110 = vector.multi_reduction <add>, %109, %cst_90 [1] : vector<2x10xf32> to vector<2xf32>
    %111 = vector.shape_cast %110 : vector<2xf32> to vector<2x1xf32>
    %112 = vector.broadcast %111 : vector<2x1xf32> to vector<2x10xf32>
    %113 = arith.divf %109, %112 : vector<2x10xf32>
    %c0_91 = arith.constant 0 : index
    %c0_92 = arith.constant 0 : index
    %114 = vector.load %arg7[%c0_91, %c0_92] : memref<2x10xf32, #tpu.memory_space<vmem>>, vector<2x10xf32>
    tpu.vector_store %arg7[%c0_91, %c0_92], %113 {strides = array<i32>} : memref<2x10xf32, #tpu.memory_space<vmem>>, vector<2x10xf32>,
    return
  }
  func.func @transform_0(%arg0: i32) -> (i32, i32, i32) {
    %c0_i32 = arith.constant 0 : i32
    %c0_i32_0 = arith.constant 0 : i32
    %c0_i32_1 = arith.constant 0 : i32
    return %arg0, %c0_i32, %c0_i32_0 : i32, i32, i32
  }
  func.func @transform_1(%arg0: i32) -> (i32, i32, i32) {
    %c0_i32 = arith.constant 0 : i32
    %c0_i32_0 = arith.constant 0 : i32
    %c0_i32_1 = arith.constant 0 : i32
    %c0_i32_2 = arith.constant 0 : i32
    return %c0_i32, %c0_i32_0, %c0_i32_1 : i32, i32, i32
  }
  func.func @transform_2(%arg0: i32) -> (i32, i32, i32) {
    %c0_i32 = arith.constant 0 : i32
    %c0_i32_0 = arith.constant 0 : i32
    %c0_i32_1 = arith.constant 0 : i32
    %c0_i32_2 = arith.constant 0 : i32
    return %c0_i32, %c0_i32_0, %c0_i32_1 : i32, i32, i32
  }
  func.func @transform_3(%arg0: i32) -> (i32, i32, i32) {
    %c0_i32 = arith.constant 0 : i32
    %c0_i32_0 = arith.constant 0 : i32
    %c0_i32_1 = arith.constant 0 : i32
    %c0_i32_2 = arith.constant 0 : i32
    return %c0_i32, %c0_i32_0, %c0_i32_1 : i32, i32, i32
  }
  func.func @transform_4(%arg0: i32) -> (i32, i32) {
    %c0_i32 = arith.constant 0 : i32
    %c0_i32_0 = arith.constant 0 : i32
    %c0_i32_1 = arith.constant 0 : i32
    return %c0_i32, %c0_i32_0 : i32, i32
  }
  func.func @transform_5(%arg0: i32) -> (i32, i32) {
    %c0_i32 = arith.constant 0 : i32
    %c0_i32_0 = arith.constant 0 : i32
    %c0_i32_1 = arith.constant 0 : i32
    return %c0_i32, %c0_i32_0 : i32, i32
  }
  func.func @transform_6(%arg0: i32) -> (i32, i32) {
    %c0_i32 = arith.constant 0 : i32
    %c0_i32_0 = arith.constant 0 : i32
    return %arg0, %c0_i32 : i32, i32
  }
}

</mosaic_0001>

<llo_original>
// kernel: _forward_impl.1
$region0: #{_forward_impl.1}
  #allocation0 [shape = 'u32[]', space=smem, size = 0x4, offset = 0x4, fixed_abs, tag = 'smem constant byte address 0x4 - core index']
  #allocation1 [shape = 'u32[144,128]{1,0:T(1,128)}', space=vmem, size = 0x12000, scoped, tag = 'internal scratch']
  #allocation2 [shape = 'f32[2,32,256]{2,1,0:T(8,128)}', space=vmem, size = 0x10000, scoped, tag = 'scratch operand']
  %s0 = inlined_call_operand.vmem [shape: f32[2,3,256], index: 0, kind: input, shape index: {}]
  %s1 = inlined_call_operand.vmem [shape: f32[2,8,32], index: 1, kind: input, shape index: {}]
  %s2 = inlined_call_operand.vmem [shape: f32[9,3,256], index: 2, kind: input, shape index: {}]
  %s3 = inlined_call_operand.vmem [shape: f32[9,3,256], index: 3, kind: input, shape index: {}]
  %s4 = inlined_call_operand.vmem [shape: f32[8,10], index: 4, kind: input, shape index: {}]
  %s5 = inlined_call_operand.vmem [shape: f32[1,10], index: 5, kind: input, shape index: {}]
  %s6 = inlined_call_operand.hbm [shape: f32[2,10], index: 6, kind: output, shape index: {}]
  %s7 = sld [smem:[#allocation0]]
  $region34: #{_forward_impl.1} parent=0
    _
  %s9 = ssub.s32 1, %s7
  %s10 = scalar_select 0, %s9, %s7
  $region1: #{_forward_impl.1} parent=0
    #allocation3 [shape = 'u8[1024]{0}', space=vmem, size = 0x400, scoped, tag = 'output window, operand 0, single buffered']
    #allocation4 [shape = 's32[1]{0}', space=sflag, size = 0x4, scoped, tag = 'scoped memory for _forward_impl.1']
    %11 = vsyncpa [#allocation4], 0
    // Predicated region
    $region2: #{_forward_impl.1} parent=1 // pred_check
      _
    $region3: #{_forward_impl.1} parent=1 // pred_check_branch
      %13 = sbr.rel (0) target = $region5
    $region4: #{_forward_impl.1} parent=1 // pred_region
      _
    $region5: #{_forward_impl.1} parent=1 // pred_fallthru
      _
    // Predicated region
    $region6: #{_forward_impl.1} parent=1 // pred_check
      _
    $region7: #{_forward_impl.1} parent=1 // pred_check_branch
      %15 = sbr.rel (0) target = $region9
    $region8: #{_forward_impl.1} parent=1 // pred_region
      _
    $region9: #{_forward_impl.1} parent=1 // pred_fallthru
      _
    // Predicated region
    $region10: #{_forward_impl.1} parent=1 // pred_check
      _
    $region11: #{_forward_impl.1} parent=1 // pred_check_branch
      %17 = sbr.rel (0) target = $region13
    $region12: #{_forward_impl.1} parent=1 // pred_region
      _
    $region13: #{_forward_impl.1} parent=1 // pred_fallthru
      _
    // Predicated region
    $region14: #{_forward_impl.1} parent=1 // pred_check
      _
    $region15: #{_forward_impl.1} parent=1 // pred_check_branch
      %19 = sbr.rel (0) target = $region17
    $region16: #{_forward_impl.1} parent=1 // pred_region
      _
    $region17: #{_forward_impl.1} parent=1 // pred_fallthru
      _
    // Predicated region
    $region18: #{_forward_impl.1} parent=1 // pred_check
      _
    $region19: #{_forward_impl.1} parent=1 // pred_check_branch
      %21 = sbr.rel (0) target = $region21
    $region20: #{_forward_impl.1} parent=1 // pred_region
      _
    $region21: #{_forward_impl.1} parent=1 // pred_fallthru
      _
    // Predicated region
    $region22: #{_forward_impl.1} parent=1 // pred_check
      _
    $region23: #{_forward_impl.1} parent=1 // pred_check_branch
      %23 = sbr.rel (0) target = $region25
    $region24: #{_forward_impl.1} parent=1 // pred_region
      _
    $region25: #{_forward_impl.1} parent=1 // pred_fallthru
      _
    %v24 = vlaneseq
    %vm25 = vcmp.ge.s32.totalorder %v24, 0
    %vm26 = vcmp.lt.s32.totalorder %v24, 256
    %vm27 = vmand %vm25, %vm26
    %s28 = scalar_lea.vmem [#allocation2], 51
    %29 = vst.msk [vmem:[%s28] ss:$8 sm:$0x3] %vm27, 1.0
    %30 = vst.msk [vmem:[%s28] ss:$8 sm:$0x0] %vm27, 1.0
    %s31 = scalar_lea.vmem [#allocation2], 115
    %32 = vst.msk [vmem:[%s31] ss:$8 sm:$0x3] %vm27, 1.0
    %33 = vst.msk [vmem:[%s31] ss:$8 sm:$0x0] %vm27, 1.0
    %34 = vst [vmem:[#allocation2 + $0x30] sm:$0xf0] 0.0
    %35 = vst [vmem:[#allocation2 + $0x38] sm:$0xf0] 0.0
    %36 = vst [vmem:[#allocation2 + $0x70] sm:$0xf0] 0.0
    %37 = vst [vmem:[#allocation2 + $0x78] sm:$0xf0] 0.0
    %v38 = vld [vmem:[%s0] sm:$0x77]
    %v39 = vld [vmem:[%s0 + $0x8] sm:$0x77]
    %v40 = vld [vmem:[%s2] sm:$0x77]
    %v41 = vld [vmem:[%s3] sm:$0x77]
    %v44 = vcombine.high %v38, %v38
    %v45 = vcombine.high %v39, %v39
    %46 = vrot.lane.b32.xlu0 %v44, 17
    %v47 = vpop.permute.xlu0 %46
    %48 = vrot.lane.b32.xlu0 %v45, 17
    %v49 = vpop.permute.xlu0 %48
    %52 = vrot.lane.b32.xlu0 %v38, 17
    %v53 = vpop.permute.xlu0 %52
    %54 = vrot.lane.b32.xlu0 %v39, 17
    %v55 = vpop.permute.xlu0 %54
    %vm56 = vcmask 138240
    %v57 = vsel %vm56, %v53, %v47
    %v58 = vsel %vm56, %v55, %v49
    %v63 = vsel %vm56, %v47, %v53
    %v64 = vsel %vm56, %v49, %v55
    %v66 = vcombine.high %v40, %v40
    %v68 = vmul.f32 %v63, %v40
    %v69 = vmul.f32 %v57, %v66
    %v70 = vmul.f32 %v64, %v40
    %v71 = vmul.f32 %v58, %v66
    %v73 = vcombine.high %v41, %v41
    %v75 = vadd.f32 %v68, %v41
    %v76 = vadd.f32 %v69, %v73
    %v77 = vadd.f32 %v70, %v41
    %v78 = vadd.f32 %v71, %v73
    %79 = vst [vmem:[#allocation2] sm:$0x7] %v75
    %80 = vst [vmem:[#allocation2 + $0x8] sm:$0x7] %v76
    %81 = vst [vmem:[#allocation2 + $0x40] sm:$0x7] %v77
    %82 = vst [vmem:[#allocation2 + $0x48] sm:$0x7] %v78
    %s83 = scalar_lea.vmem %s2, 8
    %v84 = vld [vmem:[%s83] sm:$0x77]
    %s85 = scalar_lea.vmem %s3, 8
    %v86 = vld [vmem:[%s85] sm:$0x77]
    %87 = vrot.lane.b32.xlu0 %v44, 16
    %v88 = vpop.permute.xlu0 %87
    %89 = vrot.lane.b32.xlu0 %v45, 16
    %v90 = vpop.permute.xlu0 %89
    %93 = vrot.lane.b32.xlu0 %v38, 16
    %v94 = vpop.permute.xlu0 %93
    %95 = vrot.lane.b32.xlu0 %v39, 16
    %v96 = vpop.permute.xlu0 %95
    %vm97 = vcmask 130048
    %v98 = vsel %vm97, %v94, %v88
    %v99 = vsel %vm97, %v96, %v90
    %v104 = vsel %vm97, %v88, %v94
    %v105 = vsel %vm97, %v90, %v96
    %v107 = vcombine.high %v84, %v84
    %v109 = vmul.f32 %v104, %v84
    %v110 = vmul.f32 %v98, %v107
    %v111 = vmul.f32 %v105, %v84
    %v112 = vmul.f32 %v99, %v107
    %v114 = vcombine.high %v86, %v86
    %v116 = vadd.f32 %v109, %v86
    %v117 = vadd.f32 %v110, %v114
    %v118 = vadd.f32 %v111, %v86
    %v119 = vadd.f32 %v112, %v114
    %v124 = vrot.slane %v116, 5
    %v125 = vrot.slane %v117, 5
    %v126 = vrot.slane %v118, 5
    %v127 = vrot.slane %v119, 5
    %132 = vst [vmem:[#allocation2] sm:$0x38] %v124
    %133 = vst [vmem:[#allocation2 + $0x8] sm:$0x38] %v125
    %134 = vst [vmem:[#allocation2 + $0x40] sm:$0x38] %v126
    %135 = vst [vmem:[#allocation2 + $0x48] sm:$0x38] %v127
    %s136 = scalar_lea.vmem %s2, 16
    %v137 = vld [vmem:[%s136] sm:$0x77]
    %s138 = scalar_lea.vmem %s3, 16
    %v139 = vld [vmem:[%s138] sm:$0x77]
    %140 = vrot.lane.b32.xlu0 %v44, 15
    %v141 = vpop.permute.xlu0 %140
    %142 = vrot.lane.b32.xlu0 %v45, 15
    %v143 = vpop.permute.xlu0 %142
    %146 = vrot.lane.b32.xlu0 %v38, 15
    %v147 = vpop.permute.xlu0 %146
    %148 = vrot.lane.b32.xlu0 %v39, 15
    %v149 = vpop.permute.xlu0 %148
    %vm150 = vcmask 121856
    %v151 = vsel %vm150, %v147, %v141
    %v152 = vsel %vm150, %v149, %v143
    %v157 = vsel %vm150, %v141, %v147
    %v158 = vsel %vm150, %v143, %v149
    %v160 = vcombine.high %v137, %v137
    %v162 = vmul.f32 %v157, %v137
    %v163 = vmul.f32 %v151, %v160
    %v164 = vmul.f32 %v158, %v137
    %v165 = vmul.f32 %v152, %v160
    %v167 = vcombine.high %v139, %v139
    %v169 = vadd.f32 %v162, %v139
    %v170 = vadd.f32 %v163, %v167
    %v171 = vadd.f32 %v164, %v139
    %v172 = vadd.f32 %v165, %v167
    %v177 = vrot.slane %v169, 2
    %v178 = vrot.slane %v170, 2
    %v179 = vrot.slane %v171, 2
    %v180 = vrot.slane %v172, 2
    %185 = vst [vmem:[#allocation2] sm:$0xc0] %v177
    %186 = vst [vmem:[#allocation2 + $0x8] sm:$0xc0] %v178
    %187 = vst [vmem:[#allocation2 + $0x10] sm:$0x1] %v177
    %188 = vst [vmem:[#allocation2 + $0x18] sm:$0x1] %v178
    %189 = vst [vmem:[#allocation2 + $0x40] sm:$0xc0] %v179
    %190 = vst [vmem:[#allocation2 + $0x48] sm:$0xc0] %v180
    %191 = vst [vmem:[#allocation2 + $0x50] sm:$0x1] %v179
    %192 = vst [vmem:[#allocation2 + $0x58] sm:$0x1] %v180
    %s193 = scalar_lea.vmem %s2, 24
    %v194 = vld [vmem:[%s193] sm:$0x77]
    %s195 = scalar_lea.vmem %s3, 24
    %v196 = vld [vmem:[%s195] sm:$0x77]
    %197 = vrot.lane.b32.xlu0 %v44, 1
    %v198 = vpop.permute.xlu0 %197
    %199 = vrot.lane.b32.xlu0 %v45, 1
    %v200 = vpop.permute.xlu0 %199
    %203 = vrot.lane.b32.xlu0 %v38, 1
    %v204 = vpop.permute.xlu0 %203
    %205 = vrot.lane.b32.xlu0 %v39, 1
    %v206 = vpop.permute.xlu0 %205
    %vm207 = vcmask 7168
    %v208 = vsel %vm207, %v204, %v198
    %v209 = vsel %vm207, %v206, %v200
    %v214 = vsel %vm207, %v198, %v204
    %v215 = vsel %vm207, %v200, %v206
    %v217 = vcombine.high %v194, %v194
    %v219 = vmul.f32 %v214, %v194
    %v220 = vmul.f32 %v208, %v217
    %v221 = vmul.f32 %v215, %v194
    %v222 = vmul.f32 %v209, %v217
    %v224 = vcombine.high %v196, %v196
    %v226 = vadd.f32 %v219, %v196
    %v227 = vadd.f32 %v220, %v224
    %v228 = vadd.f32 %v221, %v196
    %v229 = vadd.f32 %v222, %v224
    %v234 = vrot.slane %v226, 7
    %v235 = vrot.slane %v227, 7
    %v236 = vrot.slane %v228, 7
    %v237 = vrot.slane %v229, 7
    %242 = vst [vmem:[#allocation2 + $0x10] sm:$0xe] %v234
    %243 = vst [vmem:[#allocation2 + $0x18] sm:$0xe] %v235
    %244 = vst [vmem:[#allocation2 + $0x50] sm:$0xe] %v236
    %245 = vst [vmem:[#allocation2 + $0x58] sm:$0xe] %v237
    %s246 = scalar_lea.vmem %s2, 32
    %v247 = vld [vmem:[%s246] sm:$0x77]
    %s248 = scalar_lea.vmem %s3, 32
    %v249 = vld [vmem:[%s248] sm:$0x77]
    %v250 = vmul.f32 %v38, %v247
    %v251 = vmul.f32 %v39, %v247
    %v252 = vadd.f32 %v250, %v249
    %v253 = vadd.f32 %v251, %v249
    %v256 = vcombine.low %v252, %v252
    %v257 = vcombine.low %v253, %v253
    %260 = vst [vmem:[#allocation2 + $0x10] sm:$0x70] %v256
    %261 = vst [vmem:[#allocation2 + $0x18] sm:$0x70] %v252
    %262 = vst [vmem:[#allocation2 + $0x50] sm:$0x70] %v257
    %263 = vst [vmem:[#allocation2 + $0x58] sm:$0x70] %v253
    %s264 = scalar_lea.vmem %s2, 40
    %v265 = vld [vmem:[%s264] sm:$0x77]
    %s266 = scalar_lea.vmem %s3, 40
    %v267 = vld [vmem:[%s266] sm:$0x77]
    %268 = vrot.lane.b32.xlu0 %v38, 127
    %v269 = vpop.permute.xlu0 %268
    %270 = vrot.lane.b32.xlu0 %v44, 127
    %v271 = vpop.permute.xlu0 %270
    %272 = vrot.lane.b32.xlu0 %v39, 127
    %v273 = vpop.permute.xlu0 %272
    %274 = vrot.lane.b32.xlu0 %v45, 127
    %v275 = vpop.permute.xlu0 %274
    %vm276 = vcmask 1039360
    %v277 = vsel %vm276, %v269, %v271
    %v278 = vsel %vm276, %v273, %v275
    %v285 = vsel %vm276, %v271, %v269
    %v286 = vsel %vm276, %v275, %v273
    %v288 = vcombine.high %v265, %v265
    %v290 = vmul.f32 %v277, %v265
    %v291 = vmul.f32 %v285, %v288
    %v292 = vmul.f32 %v278, %v265
    %v293 = vmul.f32 %v286, %v288
    %v295 = vcombine.high %v267, %v267
    %v297 = vadd.f32 %v290, %v267
    %v298 = vadd.f32 %v291, %v295
    %v299 = vadd.f32 %v292, %v267
    %v300 = vadd.f32 %v293, %v295
    %v305 = vrot.slane %v297, 1
    %v306 = vrot.slane %v298, 1
    %v307 = vrot.slane %v299, 1
    %v308 = vrot.slane %v300, 1
    %313 = vst [vmem:[#allocation2 + $0x10] sm:$0x80] %v305
    %314 = vst [vmem:[#allocation2 + $0x18] sm:$0x80] %v306
    %315 = vst [vmem:[#allocation2 + $0x20] sm:$0x3] %v305
    %316 = vst [vmem:[#allocation2 + $0x28] sm:$0x3] %v306
    %317 = vst [vmem:[#allocation2 + $0x50] sm:$0x80] %v307
    %318 = vst [vmem:[#allocation2 + $0x58] sm:$0x80] %v308
    %319 = vst [vmem:[#allocation2 + $0x60] sm:$0x3] %v307
    %320 = vst [vmem:[#allocation2 + $0x68] sm:$0x3] %v308
    %s321 = scalar_lea.vmem %s2, 48
    %v322 = vld [vmem:[%s321] sm:$0x77]
    %s323 = scalar_lea.vmem %s3, 48
    %v324 = vld [vmem:[%s323] sm:$0x77]
    %325 = vrot.lane.b32.xlu0 %v38, 113
    %v326 = vpop.permute.xlu0 %325
    %327 = vrot.lane.b32.xlu0 %v44, 113
    %v328 = vpop.permute.xlu0 %327
    %329 = vrot.lane.b32.xlu0 %v39, 113
    %v330 = vpop.permute.xlu0 %329
    %331 = vrot.lane.b32.xlu0 %v45, 113
    %v332 = vpop.permute.xlu0 %331
    %vm333 = vcmask 924672
    %v334 = vsel %vm333, %v326, %v328
    %v335 = vsel %vm333, %v330, %v332
    %v342 = vsel %vm333, %v328, %v326
    %v343 = vsel %vm333, %v332, %v330
    %v345 = vcombine.high %v322, %v322
    %v347 = vmul.f32 %v334, %v322
    %v348 = vmul.f32 %v342, %v345
    %v349 = vmul.f32 %v335, %v322
    %v350 = vmul.f32 %v343, %v345
    %v352 = vcombine.high %v324, %v324
    %v354 = vadd.f32 %v347, %v324
    %v355 = vadd.f32 %v348, %v352
    %v356 = vadd.f32 %v349, %v324
    %v357 = vadd.f32 %v350, %v352
    %v362 = vrot.slane %v354, 6
    %v363 = vrot.slane %v355, 6
    %v364 = vrot.slane %v356, 6
    %v365 = vrot.slane %v357, 6
    %370 = vst [vmem:[#allocation2 + $0x20] sm:$0x1c] %v362
    %371 = vst [vmem:[#allocation2 + $0x28] sm:$0x1c] %v363
    %372 = vst [vmem:[#allocation2 + $0x60] sm:$0x1c] %v364
    %373 = vst [vmem:[#allocation2 + $0x68] sm:$0x1c] %v365
    %s374 = scalar_lea.vmem %s2, 56
    %v375 = vld [vmem:[%s374] sm:$0x77]
    %s376 = scalar_lea.vmem %s3, 56
    %v377 = vld [vmem:[%s376] sm:$0x77]
    %378 = vrot.lane.b32.xlu0 %v38, 112
    %v379 = vpop.permute.xlu0 %378
    %380 = vrot.lane.b32.xlu0 %v44, 112
    %v381 = vpop.permute.xlu0 %380
    %382 = vrot.lane.b32.xlu0 %v39, 112
    %v383 = vpop.permute.xlu0 %382
    %384 = vrot.lane.b32.xlu0 %v45, 112
    %v385 = vpop.permute.xlu0 %384
    %vm386 = vcmask 916480
    %v387 = vsel %vm386, %v379, %v381
    %v388 = vsel %vm386, %v383, %v385
    %v395 = vsel %vm386, %v381, %v379
    %v396 = vsel %vm386, %v385, %v383
    %v398 = vcombine.high %v375, %v375
    %v400 = vmul.f32 %v387, %v375
    %v401 = vmul.f32 %v395, %v398
    %v402 = vmul.f32 %v388, %v375
    %v403 = vmul.f32 %v396, %v398
    %v405 = vcombine.high %v377, %v377
    %v407 = vadd.f32 %v400, %v377
    %v408 = vadd.f32 %v401, %v405
    %v409 = vadd.f32 %v402, %v377
    %v410 = vadd.f32 %v403, %v405
    %v415 = vrot.slane %v407, 3
    %v416 = vrot.slane %v408, 3
    %v417 = vrot.slane %v409, 3
    %v418 = vrot.slane %v410, 3
    %423 = vst [vmem:[#allocation2 + $0x20] sm:$0xe0] %v415
    %424 = vst [vmem:[#allocation2 + $0x28] sm:$0xe0] %v416
    %425 = vst [vmem:[#allocation2 + $0x60] sm:$0xe0] %v417
    %426 = vst [vmem:[#allocation2 + $0x68] sm:$0xe0] %v418
    %s427 = scalar_lea.vmem %s2, 64
    %v428 = vld [vmem:[%s427] sm:$0x77]
    %s429 = scalar_lea.vmem %s3, 64
    %v430 = vld [vmem:[%s429] sm:$0x77]
    %431 = vrot.lane.b32.xlu0 %v38, 111
    %v432 = vpop.permute.xlu0 %431
    %433 = vrot.lane.b32.xlu0 %v44, 111
    %v434 = vpop.permute.xlu0 %433
    %435 = vrot.lane.b32.xlu0 %v39, 111
    %v436 = vpop.permute.xlu0 %435
    %437 = vrot.lane.b32.xlu0 %v45, 111
    %v438 = vpop.permute.xlu0 %437
    %vm439 = vcmask 908288
    %v440 = vsel %vm439, %v432, %v434
    %v441 = vsel %vm439, %v436, %v438
    %v448 = vsel %vm439, %v434, %v432
    %v449 = vsel %vm439, %v438, %v436
    %v451 = vcombine.high %v428, %v428
    %v453 = vmul.f32 %v440, %v428
    %v454 = vmul.f32 %v448, %v451
    %v455 = vmul.f32 %v441, %v428
    %v456 = vmul.f32 %v449, %v451
    %v458 = vcombine.high %v430, %v430
    %v460 = vadd.f32 %v453, %v430
    %v461 = vadd.f32 %v454, %v458
    %v462 = vadd.f32 %v455, %v430
    %v463 = vadd.f32 %v456, %v458
    %464 = vst [vmem:[#allocation2 + $0x30] sm:$0x7] %v460
    %465 = vst [vmem:[#allocation2 + $0x38] sm:$0x7] %v461
    %466 = vst [vmem:[#allocation2 + $0x70] sm:$0x7] %v462
    %467 = vst [vmem:[#allocation2 + $0x78] sm:$0x7] %v463
    %v468 = vld [vmem:[%s1] sm:$0xff]
    %v469 = vld [vmem:[%s1 + $0x8] sm:$0xff]
    %v470 = vld [vmem:[#allocation2] sm:$0xff]
    %v471 = vld [vmem:[#allocation2 + $0x8] sm:$0xff]
    %v472 = vld [vmem:[#allocation2 + $0x10] sm:$0xff]
    %v473 = vld [vmem:[#allocation2 + $0x18] sm:$0xff]
    %v474 = vld [vmem:[#allocation2 + $0x20] sm:$0xff]
    %v475 = vld [vmem:[#allocation2 + $0x28] sm:$0xff]
    %v476 = vld [vmem:[#allocation2 + $0x30] sm:$0xff]
    %v477 = vld [vmem:[#allocation2 + $0x38] sm:$0xff]
    %v478 = vld [vmem:[#allocation2 + $0x40] sm:$0xff]
    %v479 = vld [vmem:[#allocation2 + $0x48] sm:$0xff]
    %v480 = vld [vmem:[#allocation2 + $0x50] sm:$0xff]
    %v481 = vld [vmem:[#allocation2 + $0x58] sm:$0xff]
    %v482 = vld [vmem:[#allocation2 + $0x60] sm:$0xff]
    %v483 = vld [vmem:[#allocation2 + $0x68] sm:$0xff]
    %v484 = vld [vmem:[#allocation2 + $0x70] sm:$0xff]
    %v485 = vld [vmem:[#allocation2 + $0x78] sm:$0xff]
    %vm486 = vcmask 261120
    %v488 = vsel %vm486, %v468, 0
    %490 = vmatprep.subr.mxu0 %v471
    %491 = vmatpush1.msra.mxu0 %v470
    %492 = vmatprep.subr.mxu0 %v473
    %493 = vmatpush1.msra.mxu0 %v472
    %494 = vmatprep.subr.mxu0 %v475
    %495 = vmatpush1.msra.mxu0 %v474
    %496 = vmatprep.subr.mxu0 %v477
    %497 = vmatpush1.msra.mxu0 %v476
    %498 = vmatprep.subr.mxu0 0.0
    %499 = vmatpush1.msra.mxu0 0.0
    %500 = vmatprep.subr.mxu0 0.0
    %501 = vmatpush1.msra.mxu0 0.0
    %502 = vmatprep.subr.mxu0 0.0
    %503 = vmatpush1.msra.mxu0 0.0
    %504 = vmatprep.subr.mxu0 0.0
    %505 = vmatpush1.msra.mxu0 0.0
    %506 = vmatprep.subr.mxu0 0.0
    %507 = vmatpush1.msra.mxu0 0.0
    %508 = vmatprep.subr.mxu0 0.0
    %509 = vmatpush1.msra.mxu0 0.0
    %510 = vmatprep.subr.mxu0 0.0
    %511 = vmatpush1.msra.mxu0 0.0
    %512 = vmatprep.subr.mxu0 0.0
    %513 = vmatpush1.msra.mxu0 0.0
    %514 = vmatprep.subr.mxu0 0.0
    %515 = vmatpush1.msra.mxu0 0.0
    %516 = vmatprep.subr.mxu0 0.0
    %517 = vmatpush1.msra.mxu0 0.0
    %518 = vmatprep.subr.mxu0 0.0
    %519 = vmatpush1.msra.mxu0 0.0
    %520 = vmatprep.subr.mxu0 0.0
    %521 = vmatpush1.msra.mxu0 0.0
    %522 = vmatprep.subr.mxu0 0.0
    %523 = vmatpush1.msra.mxu0 0.0
    %524 = vmatprep.subr.mxu0 0.0
    %525 = vmatpush1.msra.mxu0 0.0
    %526 = vmatprep.subr.mxu0 0.0
    %527 = vmatpush1.msra.mxu0 0.0
    %528 = vmatprep.subr.mxu0 0.0
    %529 = vmatpush1.msra.mxu0 0.0
    %530 = vmatprep.subr.mxu0 0.0
    %531 = vmatpush1.msra.mxu0 0.0
    %532 = vmatprep.subr.mxu0 0.0
    %533 = vmatpush1.msra.mxu0 0.0
    %534 = vmatprep.subr.mxu0 0.0
    %535 = vmatpush1.msra.mxu0 0.0
    %536 = vmatprep.subr.mxu0 0.0
    %537 = vmatpush1.msra.mxu0 0.0
    %538 = vmatprep.subr.mxu0 0.0
    %539 = vmatpush1.msra.mxu0 0.0
    %540 = vmatprep.subr.mxu0 0.0
    %541 = vmatpush1.msra.mxu0 0.0
    %542 = vmatprep.subr.mxu0 0.0
    %543 = vmatpush1.msra.mxu0 0.0
    %544 = vmatprep.subr.mxu0 0.0
    %545 = vmatpush1.msra.mxu0 0.0
    %546 = vmatprep.subr.mxu0 0.0
    %547 = vmatpush1.msra.mxu0 0.0
    %548 = vmatprep.subr.mxu0 0.0
    %549 = vmatpush1.msra.mxu0 0.0
    %550 = vmatprep.subr.mxu0 0.0
    %551 = vmatpush1.msra.mxu0 0.0
    %552 = vmatprep.subr.mxu0 0.0
    %553 = vmatpush1.msra.mxu0 0.0
    %554 = vmatprep.mubr.f32.mxu0 0.0
    %555 = vmatmul.mubr.f32.gmra.mrb[0].mxu0 %v488
    %v556 = vpop.f32.mrb[0].mxu0
    %v557 = vadd.f32 0.0, %v556
    %v558 = vpop.f32.mrb[0].mxu0
    %v559 = vadd.f32 0.0, %v558
    %560 = vdwg.mxu0
    %v562 = vsel %vm486, %v469, 0
    %564 = vmatprep.subr.mxu0 %v479
    %565 = vmatpush1.msra.mxu0 %v478
    %566 = vmatprep.subr.mxu0 %v481
    %567 = vmatpush1.msra.mxu0 %v480
    %568 = vmatprep.subr.mxu0 %v483
    %569 = vmatpush1.msra.mxu0 %v482
    %570 = vmatprep.subr.mxu0 %v485
    %571 = vmatpush1.msra.mxu0 %v484
    %572 = vmatprep.subr.mxu0 0.0
    %573 = vmatpush1.msra.mxu0 0.0
    %574 = vmatprep.subr.mxu0 0.0
    %575 = vmatpush1.msra.mxu0 0.0
    %576 = vmatprep.subr.mxu0 0.0
    %577 = vmatpush1.msra.mxu0 0.0
    %578 = vmatprep.subr.mxu0 0.0
    %579 = vmatpush1.msra.mxu0 0.0
    %580 = vmatprep.subr.mxu0 0.0
    %581 = vmatpush1.msra.mxu0 0.0
    %582 = vmatprep.subr.mxu0 0.0
    %583 = vmatpush1.msra.mxu0 0.0
    %584 = vmatprep.subr.mxu0 0.0
    %585 = vmatpush1.msra.mxu0 0.0
    %586 = vmatprep.subr.mxu0 0.0
    %587 = vmatpush1.msra.mxu0 0.0
    %588 = vmatprep.subr.mxu0 0.0
    %589 = vmatpush1.msra.mxu0 0.0
    %590 = vmatprep.subr.mxu0 0.0
    %591 = vmatpush1.msra.mxu0 0.0
    %592 = vmatprep.subr.mxu0 0.0
    %593 = vmatpush1.msra.mxu0 0.0
    %594 = vmatprep.subr.mxu0 0.0
    %595 = vmatpush1.msra.mxu0 0.0
    %596 = vmatprep.subr.mxu0 0.0
    %597 = vmatpush1.msra.mxu0 0.0
    %598 = vmatprep.subr.mxu0 0.0
    %599 = vmatpush1.msra.mxu0 0.0
    %600 = vmatprep.subr.mxu0 0.0
    %601 = vmatpush1.msra.mxu0 0.0
    %602 = vmatprep.subr.mxu0 0.0
    %603 = vmatpush1.msra.mxu0 0.0
    %604 = vmatprep.subr.mxu0 0.0
    %605 = vmatpush1.msra.mxu0 0.0
    %606 = vmatprep.subr.mxu0 0.0
    %607 = vmatpush1.msra.mxu0 0.0
    %608 = vmatprep.subr.mxu0 0.0
    %609 = vmatpush1.msra.mxu0 0.0
    %610 = vmatprep.subr.mxu0 0.0
    %611 = vmatpush1.msra.mxu0 0.0
    %612 = vmatprep.subr.mxu0 0.0
    %613 = vmatpush1.msra.mxu0 0.0
    %614 = vmatprep.subr.mxu0 0.0
    %615 = vmatpush1.msra.mxu0 0.0
    %616 = vmatprep.subr.mxu0 0.0
    %617 = vmatpush1.msra.mxu0 0.0
    %618 = vmatprep.subr.mxu0 0.0
    %619 = vmatpush1.msra.mxu0 0.0
    %620 = vmatprep.subr.mxu0 0.0
    %621 = vmatpush1.msra.mxu0 0.0
    %622 = vmatprep.subr.mxu0 0.0
    %623 = vmatpush1.msra.mxu0 0.0
    %624 = vmatprep.subr.mxu0 0.0
    %625 = vmatpush1.msra.mxu0 0.0
    %626 = vmatprep.subr.mxu0 0.0
    %627 = vmatpush1.msra.mxu0 0.0
    %628 = vmatprep.mubr.f32.mxu0 0.0
    %629 = vmatmul.mubr.f32.gmra.mrb[0].mxu0 %v562
    %v630 = vpop.f32.mrb[0].mxu0
    %v631 = vadd.f32 0.0, %v630
    %v632 = vpop.f32.mrb[0].mxu0
    %v633 = vadd.f32 0.0, %v632
    %634 = vdwg.mxu0
    %v635 = vmax.f32 %v557, 0.0
    %v636 = vmax.f32 %v559, 0.0
    %v637 = vmax.f32 %v631, 0.0
    %v638 = vmax.f32 %v633, 0.0
    %v639 = vadd.f32 %v635, %v636
    %640 = vadd.xlane.f32.xlu0 %v639
    %v641 = vpop.xlane.xlu0 %640
    %v642 = vadd.f32 %v637, %v638
    %643 = vadd.xlane.f32.xlu0 %v642
    %v644 = vpop.xlane.xlu0 %643
    %v645 = vmul.f32 %v641, 0.00390625
    %v646 = vmul.f32 %v644, 0.00390625
    %v647 = vld [vmem:[%s4] sm:$0xff]
    %v648 = vld [vmem:[%s5] sm:$0x1]
    %v650 = vlaneseq
    %v651 = vshrl.u32 %v650, 7
    %v652 = vsub.s32 0, %v651
    %v653 = vrot.slane %v648, %v652
    %v657 = vlaneseq
    %v658 = vand.u32 %v657, 127
    %v659 = vlaneseq
    %v660 = vshrl.u32 %v659, 7
    %v661 = vsub.s32 %v658, %v660
    %v662 = vrot.slane %v645, %v661
    %v663 = vlaneseq
    %v664 = vshrl.u32 %v663, 7
    %v665 = vsub.s32 %v658, %v664
    %v666 = vrot.slane %v646, %v665
    %vm667 = vcmask 1041409
    %v668 = vsel %vm667, %v666, %v662
    %vm669 = vcmask 64512
    %v670 = vsel %vm669, %v668, 0
    %672 = vmatprep.subr.mxu0 0.0
    %673 = vmatpush1.msra.mxu0 %v647
    %674 = vmatprep.subr.mxu0 0.0
    %675 = vmatpush1.msra.mxu0 0.0
    %676 = vmatprep.subr.mxu0 0.0
    %677 = vmatpush1.msra.mxu0 0.0
    %678 = vmatprep.subr.mxu0 0.0
    %679 = vmatpush1.msra.mxu0 0.0
    %680 = vmatprep.subr.mxu0 0.0
    %681 = vmatpush1.msra.mxu0 0.0
    %682 = vmatprep.subr.mxu0 0.0
    %683 = vmatpush1.msra.mxu0 0.0
    %684 = vmatprep.subr.mxu0 0.0
    %685 = vmatpush1.msra.mxu0 0.0
    %686 = vmatprep.subr.mxu0 0.0
    %687 = vmatpush1.msra.mxu0 0.0
    %688 = vmatprep.subr.mxu0 0.0
    %689 = vmatpush1.msra.mxu0 0.0
    %690 = vmatprep.subr.mxu0 0.0
    %691 = vmatpush1.msra.mxu0 0.0
    %692 = vmatprep.subr.mxu0 0.0
    %693 = vmatpush1.msra.mxu0 0.0
    %694 = vmatprep.subr.mxu0 0.0
    %695 = vmatpush1.msra.mxu0 0.0
    %696 = vmatprep.subr.mxu0 0.0
    %697 = vmatpush1.msra.mxu0 0.0
    %698 = vmatprep.subr.mxu0 0.0
    %699 = vmatpush1.msra.mxu0 0.0
    %700 = vmatprep.subr.mxu0 0.0
    %701 = vmatpush1.msra.mxu0 0.0
    %702 = vmatprep.subr.mxu0 0.0
    %703 = vmatpush1.msra.mxu0 0.0
    %704 = vmatprep.subr.mxu0 0.0
    %705 = vmatpush1.msra.mxu0 0.0
    %706 = vmatprep.subr.mxu0 0.0
    %707 = vmatpush1.msra.mxu0 0.0
    %708 = vmatprep.subr.mxu0 0.0
    %709 = vmatpush1.msra.mxu0 0.0
    %710 = vmatprep.subr.mxu0 0.0
    %711 = vmatpush1.msra.mxu0 0.0
    %712 = vmatprep.subr.mxu0 0.0
    %713 = vmatpush1.msra.mxu0 0.0
    %714 = vmatprep.subr.mxu0 0.0
    %715 = vmatpush1.msra.mxu0 0.0
    %716 = vmatprep.subr.mxu0 0.0
    %717 = vmatpush1.msra.mxu0 0.0
    %718 = vmatprep.subr.mxu0 0.0
    %719 = vmatpush1.msra.mxu0 0.0
    %720 = vmatprep.subr.mxu0 0.0
    %721 = vmatpush1.msra.mxu0 0.0
    %722 = vmatprep.subr.mxu0 0.0
    %723 = vmatpush1.msra.mxu0 0.0
    %724 = vmatprep.subr.mxu0 0.0
    %725 = vmatpush1.msra.mxu0 0.0
    %726 = vmatprep.subr.mxu0 0.0
    %727 = vmatpush1.msra.mxu0 0.0
    %728 = vmatprep.subr.mxu0 0.0
    %729 = vmatpush1.msra.mxu0 0.0
    %730 = vmatprep.subr.mxu0 0.0
    %731 = vmatpush1.msra.mxu0 0.0
    %732 = vmatprep.subr.mxu0 0.0
    %733 = vmatpush1.msra.mxu0 0.0
    %734 = vmatprep.subr.mxu0 0.0
    %735 = vmatpush1.msra.mxu0 0.0
    %736 = vmatprep.mubr.f32.mxu0 0.0
    %737 = vmatmul.mubr.f32.gmra.mrb[0].mxu0 %v670
    %v738 = vpop.f32.mrb[0].mxu0
    %v739 = vadd.f32 %v653, %v738
    %v740 = vpop.f32.mrb[0].mxu0
    %741 = vdwg.mxu0
    %vm742 = vcmask 74752
    %v743 = vsel %vm742, %v739, -inf
    %744 = vmax.xlane.f32.xlu0 %v743
    %v745 = vpop.xlane.xlu0 %744
    %v746 = vsub.f32 %v739, %v745
    %v747 = vmul.f32 %v746, 1.442695
    %v748 = vpow.pop %v747
    %v749 = vsel %vm742, %v748, 0.0
    %750 = vadd.xlane.f32.xlu0 %v749
    %v751 = vpop.xlane.xlu0 %750
    %v752 = vrcp.pop %v751
    %v753 = vmul.f32 %v748, %v752
    %754 = vst.msk [vmem:[#allocation3] sm:$0x3] %vm742, %v753
    // Predicated region
    $region26: #{_forward_impl.1} parent=1 // pred_check
      _
    $region27: #{_forward_impl.1} parent=1 // pred_check_branch
      %756 = sbr.rel (0) target = $region29
    $region28: #{_forward_impl.1} parent=1 // pred_region
      %s758 = ssub.s32 32, 32
      %759 = vsyncadd [#allocation4], %s758
      %s761 = sshll.u32 [#allocation3], 4
      %s762 = int_to_ptr.vmem [resolvable:$true] %s761
      %764 = dma.vmem_to_hbm [thread:$0]  %s762, 32, %s6, [#allocation4]
    $region29: #{_forward_impl.1} parent=1 // pred_fallthru
      _
    // Predicated region
    $region30: #{_forward_impl.1} parent=1 // pred_check
      _
    $region31: #{_forward_impl.1} parent=1 // pred_check_branch
      %766 = sbr.rel (0) target = $region33
    $region32: #{_forward_impl.1} parent=1 // pred_region
      %767 = dma.done [#allocation4], 32
    $region33: #{_forward_impl.1} parent=1 // pred_fallthru
      _
    %768 = vsyncpa [#allocation4], 1

</llo_original>
